<compile_context>
chip_gen: v7x
topology: tpu7x:2x2x1
jax: 0.10.0
libtpu: 0.0.40
codegen_flags: <defaults>
</compile_context>

<pallas_src>
import functools

import jax
import jax.numpy as jnp
from jax.experimental import pallas as pl
from jax.experimental.pallas import tpu as pltpu

LANE = 128


def _round_up(x, m):
    return (x + m - 1) // m * m


def _padded_num_nodes(num_nodes):
    # Small graphs: pad to one lane-aligned tile.  Large graphs: pad to the tile LCM.
    if num_nodes <= 512:
        return _round_up(num_nodes, 128)
    return _round_up(num_nodes, 512)


def _tile_sizes(n_pad):
    # Conservative tiles that fit comfortably in scoped VMEM on v5e/v6e/v7x
    # (bf16 Â tile 256x512 = 256 KiB; double-buffered inputs << 32 MiB).
    if n_pad <= 512:
        return n_pad, n_pad
    return 256, 512


def gcn_layer_kernel(a_ref, x_ref, w_ref, b_ref, o_ref, acc_ref, *, apply_relu):
    """One GCN layer tile-step:  acc[i] += Â[i,k] @ (X[k] @ W);  finalize adds bias (+ReLU).

    a_ref : (tm, tk)   bf16 tile of normalized adjacency
    x_ref : (tk, Cin)  f32 tile of node features (lane-padded Cin)
    w_ref : (Cin, Cout) f32 full weight (lane-padded)
    b_ref : (1, Cout)   f32 full bias   (lane-padded)
    o_ref : (tm, Cout)  f32 output row-tile (resident across the k axis)
    acc_ref: (tm, Cout) f32 VMEM accumulator scratch
    """
    k = pl.program_id(1)

    @pl.when(k == 0)
    def _():
        acc_ref[...] = jnp.zeros_like(acc_ref)

    # X[k] @ W : full-width (128-lane) MXU pass, f32.
    xw = jnp.dot(x_ref[...], w_ref[...], preferred_element_type=jnp.float32)
    # Â[i,k] @ (XW) : bf16 MXU pass with f32 accumulation.
    acc_ref[...] += jnp.dot(
        a_ref[...], xw.astype(a_ref.dtype), preferred_element_type=jnp.float32
    )

    @pl.when(k == pl.num_programs(1) - 1)
    def _():
        out = acc_ref[...] + b_ref[...]
        if apply_relu:
            out = jnp.maximum(out, 0.0)
        o_ref[...] = out.astype(o_ref.dtype)


def gcn_layer(a_hat, x, w, b, *, tm, tk, apply_relu):
    """out = Â @ (X @ W) + b (optionally ReLU), tiled over (row_tiles, k_tiles)."""
    n_pad = a_hat.shape[0]
    c_in = x.shape[1]
    c_out = w.shape[1]
    grid = (n_pad // tm, n_pad // tk)

    kernel = functools.partial(gcn_layer_kernel, apply_relu=apply_relu)
    return pl.pallas_call(
        kernel,
        out_shape=jax.ShapeDtypeStruct((n_pad, c_out), jnp.float32),
        grid_spec=pltpu.PrefetchScalarGridSpec(
            num_scalar_prefetch=0,
            grid=grid,
            in_specs=[
                pl.BlockSpec((tm, tk), lambda i, k: (i, k)),       # Â tile (bf16)
                pl.BlockSpec((tk, c_in), lambda i, k: (k, 0)),     # X tile (f32)
                pl.BlockSpec((c_in, c_out), lambda i, k: (0, 0)),  # W (full, tiny)
                pl.BlockSpec((1, c_out), lambda i, k: (0, 0)),     # b (full, tiny)
            ],
            out_specs=pl.BlockSpec((tm, c_out), lambda i, k: (i, 0)),
            scratch_shapes=[pltpu.VMEM((tm, c_out), jnp.float32)],
        ),
        compiler_params=pltpu.CompilerParams(
            dimension_semantics=("parallel", "arbitrary"),
            vmem_limit_bytes=32 * 1024 * 1024,
        ),
    )(a_hat, x, w, b)


def precompute_normalized_adjacency(edge_index, num_nodes, n_pad):
    """Dense Â = D^-1/2 (A + I) D^-1/2, zero-padded to (n_pad, n_pad), cast to bf16.

    Built once per graph (hoisted out of the forward).  Uses one-hot matmuls instead
    of a dense scatter (TPU-friendly).  Zero padding is a mathematical no-op: padded
    rows/cols of Â are zero so padded nodes never contaminate real rows.
    """
    src = edge_index[0]
    dst = edge_index[1]
    oh_dst = jax.nn.one_hot(dst, num_nodes, dtype=jnp.float32)  # (E, N)
    oh_src = jax.nn.one_hot(src, num_nodes, dtype=jnp.float32)  # (E, N)
    a = oh_dst.T @ oh_src                                       # A[d, s] = #edges s->d
    a = a + jnp.eye(num_nodes, dtype=jnp.float32)               # self loops
    deg = a.sum(axis=1)
    dinv = jnp.where(deg > 0.0, 1.0 / jnp.sqrt(deg), 0.0)
    a_hat = dinv[:, None] * a * dinv[None, :]
    a_pad = jnp.zeros((n_pad, n_pad), jnp.float32).at[:num_nodes, :num_nodes].set(a_hat)
    return a_pad.astype(jnp.bfloat16)


def encoder_forward(node_ids, a_hat_pad, params, num_nodes):
    """Forward:  embedding -> GCNConv -> ReLU -> Dropout(eval) -> GCNConv."""
    # Embedding lookup (gather) stays in plain JAX glue.
    x = params["embedding"][node_ids].astype(jnp.float32)       # (N, Cin)
    n = x.shape[0]
    n_pad = a_hat_pad.shape[0]

    c_in = params["w1"].shape[0]
    hidden = params["w1"].shape[1]
    c_out = params["w2"].shape[1]
    c_in_p = _round_up(c_in, LANE)
    hid_p = _round_up(hidden, LANE)
    c_out_p = _round_up(c_out, LANE)

    # Zero-pad features + weights to 128 lanes (full-width MXU passes, lane-dense stores).
    x_p = jnp.zeros((n_pad, c_in_p), jnp.float32).at[:n, :c_in].set(x)
    w1_p = jnp.zeros((c_in_p, hid_p), jnp.float32).at[:c_in, :hidden].set(params["w1"])
    b1_p = jnp.zeros((1, hid_p), jnp.float32).at[:, :hidden].set(params["b1"])
    w2_p = jnp.zeros((hid_p, c_out_p), jnp.float32).at[:hidden, :c_out].set(params["w2"])
    b2_p = jnp.zeros((1, c_out_p), jnp.float32).at[:, :c_out].set(params["b2"])

    tm, tk = _tile_sizes(n_pad)

    # Layer 1: GCNConv(Cin -> 2*Cout) + ReLU.
    h = gcn_layer(a_hat_pad, x_p, w1_p, b1_p, tm=tm, tk=tk, apply_relu=True)
    # TODO(synk): Dropout(p=0.8) treated as eval-mode identity (deterministic forward);
    # an in-kernel pltpu.prng_seed/prng_random_bits mask could implement training mode.

    # Layer 2: GCNConv(2*Cout -> Cout).
    out = gcn_layer(a_hat_pad, h, w2_p, b2_p, tm=tm, tk=tk, apply_relu=False)

    # Slice away node padding and lane padding.
    return out[:num_nodes, :c_out]


def init_params(key, num_nodes, in_channels, out_channels):
    k_emb, k_w1, k_w2 = jax.random.split(key, 3)
    hidden = 2 * out_channels
    return {
        # torch.nn.Embedding default init ~ N(0, 1)
        "embedding": jax.random.normal(k_emb, (num_nodes, in_channels), jnp.float32),
        # GCNConv weights (glorot-ish scaled normal), biases zero (PyG default zeros bias)
        "w1": jax.random.normal(k_w1, (in_channels, hidden), jnp.float32)
        * jnp.sqrt(2.0 / (in_channels + hidden)),
        "b1": jnp.zeros((1, hidden), jnp.float32),
        "w2": jax.random.normal(k_w2, (hidden, out_channels), jnp.float32)
        * jnp.sqrt(2.0 / (hidden + out_channels)),
        "b2": jnp.zeros((1, out_channels), jnp.float32),
    }


if __name__ == "__main__":
    num_nodes = 64
    in_channels = 16
    out_channels = 16

    key = jax.random.PRNGKey(0)
    params = init_params(key, num_nodes, in_channels, out_channels)

    # x: node indices (all nodes); edge_index: undirected ring graph (2, 2*N)
    node_ids = jnp.arange(num_nodes, dtype=jnp.int32)
    src = jnp.arange(num_nodes, dtype=jnp.int32)
    dst = (src + 1) % num_nodes
    edge_index = jnp.stack(
        [jnp.concatenate([src, dst]), jnp.concatenate([dst, src])], axis=0
    )  # (2, 128)

    # Â is precomputed/cached once per graph (hoisted out of the per-forward path).
    n_pad = _padded_num_nodes(num_nodes)
    a_hat_pad = precompute_normalized_adjacency(edge_index, num_nodes, n_pad)

    out = encoder_forward(node_ids, a_hat_pad, params, num_nodes)
    jax.block_until_ready(out)
    assert out.shape == (num_nodes, out_channels)
    assert bool(jnp.all(jnp.isfinite(out)))
    print("KERNEL_OK")
</pallas_src>

<mosaic_0001>
module attributes {stable_mosaic.version = 11 : i64} {
  func.func @gcn_layer_kernel(%arg0: i32, %arg1: i32, %arg2: memref<128x128xbf16, #tpu.memory_space<vmem>>, %arg3: memref<128x128xf32, #tpu.memory_space<vmem>>, %arg4: memref<128x128xf32, #tpu.memory_space<vmem>>, %arg5: memref<1x128xf32, #tpu.memory_space<vmem>>, %arg6: memref<128x128xf32, #tpu.memory_space<vmem>>, %arg7: memref<128x128xf32, #tpu.memory_space<vmem>>) attributes {dimension_semantics = [#tpu.dimension_semantics<parallel>, #tpu.dimension_semantics<arbitrary>], iteration_bounds = array<i64: 1, 1>, scalar_prefetch = 0 : i64, scratch_operands = 1 : i64, tpu.core_type = #tpu.core_type<tc>, window_params = [{transform_indices = @transform_0, window_bounds = array<i64: 128, 128>}, {transform_indices = @transform_1, window_bounds = array<i64: 128, 128>}, {pipeline_mode = #tpu.pipeline_mode<synchronous>, transform_indices = @transform_2, window_bounds = array<i64: 128, 128>}, {pipeline_mode = #tpu.pipeline_mode<synchronous>, transform_indices = @transform_3, window_bounds = array<i64: 1, 128>}, {transform_indices = @transform_4, window_bounds = array<i64: 128, 128>}]} {
    %c0_i32 = arith.constant 0 : i32
    %0 = arith.cmpi eq, %arg1, %c0_i32 : i32
    %1 = arith.extui %0 : i1 to i32
    %c0_i32_0 = arith.constant 0 : i32
    %2 = arith.cmpi ne, %1, %c0_i32_0 : i32
    scf.if %2 {
      %cst_13 = arith.constant 0.000000e+00 : f32
      %15 = vector.broadcast %cst_13 : f32 to vector<128x128xf32>
      %c0_14 = arith.constant 0 : index
      %c0_15 = arith.constant 0 : index
      %16 = vector.load %arg7[%c0_14, %c0_15] : memref<128x128xf32, #tpu.memory_space<vmem>>, vector<128x128xf32>
      tpu.vector_store %arg7[%c0_14, %c0_15], %15 {strides = array<i32>} : memref<128x128xf32, #tpu.memory_space<vmem>>, vector<128x128xf32>,
    } else {
    }
    %c0 = arith.constant 0 : index
    %c0_1 = arith.constant 0 : index
    %3 = vector.load %arg3[%c0, %c0_1] : memref<128x128xf32, #tpu.memory_space<vmem>>, vector<128x128xf32>
    %c0_2 = arith.constant 0 : index
    %c0_3 = arith.constant 0 : index
    %4 = vector.load %arg4[%c0_2, %c0_3] : memref<128x128xf32, #tpu.memory_space<vmem>>, vector<128x128xf32>
    %cst = arith.constant dense<0.000000e+00> : vector<128x128xf32>
    %5 = tpu.matmul %3, %4, %cst {dimension_numbers = #tpu.dot_dimension_numbers<[1], [0], [0], [1], [0, 0, 1, 1], [], []>} : vector<128x128xf32>, vector<128x128xf32>, vector<128x128xf32> -> vector<128x128xf32>
    %c0_4 = arith.constant 0 : index
    %c0_5 = arith.constant 0 : index
    %6 = vector.load %arg7[%c0_4, %c0_5] : memref<128x128xf32, #tpu.memory_space<vmem>>, vector<128x128xf32>
    %c0_6 = arith.constant 0 : index
    %c0_7 = arith.constant 0 : index
    %7 = vector.load %arg2[%c0_6, %c0_7] : memref<128x128xbf16, #tpu.memory_space<vmem>>, vector<128x128xbf16>
    %8 = arith.truncf %5 : vector<128x128xf32> to vector<128x128xbf16>
    %cst_8 = arith.constant dense<0.000000e+00> : vector<128x128xf32>
    %9 = tpu.matmul %7, %8, %cst_8 {dimension_numbers = #tpu.dot_dimension_numbers<[1], [0], [0], [1], [0, 0, 1, 1], [], []>} : vector<128x128xbf16>, vector<128x128xbf16>, vector<128x128xf32> -> vector<128x128xf32>
    %10 = arith.addf %6, %9 : vector<128x128xf32>
    %c0_9 = arith.constant 0 : index
    %c0_10 = arith.constant 0 : index
    %11 = vector.load %arg7[%c0_9, %c0_10] : memref<128x128xf32, #tpu.memory_space<vmem>>, vector<128x128xf32>
    tpu.vector_store %arg7[%c0_9, %c0_10], %10 {strides = array<i32>} : memref<128x128xf32, #tpu.memory_space<vmem>>, vector<128x128xf32>,
    %c0_i32_11 = arith.constant 0 : i32
    %12 = arith.cmpi eq, %arg1, %c0_i32_11 : i32
    %13 = arith.extui %12 : i1 to i32
    %c0_i32_12 = arith.constant 0 : i32
    %14 = arith.cmpi ne, %13, %c0_i32_12 : i32
    scf.if %14 {
      %c0_13 = arith.constant 0 : index
      %c0_14 = arith.constant 0 : index
      %15 = vector.load %arg7[%c0_13, %c0_14] : memref<128x128xf32, #tpu.memory_space<vmem>>, vector<128x128xf32>
      %c0_15 = arith.constant 0 : index
      %c0_16 = arith.constant 0 : index
      %16 = vector.load %arg5[%c0_15, %c0_16] : memref<1x128xf32, #tpu.memory_space<vmem>>, vector<1x128xf32>
      %17 = vector.broadcast %16 : vector<1x128xf32> to vector<128x128xf32>
      %18 = arith.addf %15, %17 : vector<128x128xf32>
      %cst_17 = arith.constant 0.000000e+00 : f32
      %19 = vector.broadcast %cst_17 : f32 to vector<128x128xf32>
      %20 = arith.maximumf %18, %19 : vector<128x128xf32>
      %c0_18 = arith.constant 0 : index
      %c0_19 = arith.constant 0 : index
      %21 = vector.load %arg6[%c0_18, %c0_19] : memref<128x128xf32, #tpu.memory_space<vmem>>, vector<128x128xf32>
      tpu.vector_store %arg6[%c0_18, %c0_19], %20 {strides = array<i32>} : memref<128x128xf32, #tpu.memory_space<vmem>>, vector<128x128xf32>,
    } else {
    }
    return
  }
  func.func @transform_0(%arg0: i32, %arg1: i32) -> (i32, i32) {
    %c0_i32 = arith.constant 0 : i32
    return %arg0, %arg1 : i32, i32
  }
  func.func @transform_1(%arg0: i32, %arg1: i32) -> (i32, i32) {
    %c0_i32 = arith.constant 0 : i32
    %c0_i32_0 = arith.constant 0 : i32
    return %arg1, %c0_i32 : i32, i32
  }
  func.func @transform_2(%arg0: i32, %arg1: i32) -> (i32, i32) {
    %c0_i32 = arith.constant 0 : i32
    %c0_i32_0 = arith.constant 0 : i32
    %c0_i32_1 = arith.constant 0 : i32
    return %c0_i32, %c0_i32_0 : i32, i32
  }
  func.func @transform_3(%arg0: i32, %arg1: i32) -> (i32, i32) {
    %c0_i32 = arith.constant 0 : i32
    %c0_i32_0 = arith.constant 0 : i32
    %c0_i32_1 = arith.constant 0 : i32
    return %c0_i32, %c0_i32_0 : i32, i32
  }
  func.func @transform_4(%arg0: i32, %arg1: i32) -> (i32, i32) {
    %c0_i32 = arith.constant 0 : i32
    %c0_i32_0 = arith.constant 0 : i32
    return %arg0, %c0_i32 : i32, i32
  }
}

</mosaic_0001>

<llo_original>
// kernel: tpu_custom_call.1
$region0: #{tpu_custom_call.1}
  #allocation0 [shape = 'u32[]', space=smem, size = 0x4, offset = 0x4, fixed_abs, tag = 'smem constant byte address 0x4 - core index']
  #allocation1 [shape = 'u32[144,128]{1,0:T(1,128)}', space=vmem, size = 0x12000, scoped, tag = 'internal scratch']
  #allocation2 [shape = 'f32[128,128]{1,0:T(8,128)}', space=vmem, size = 0x10000, scoped, tag = 'scratch operand']
  %s0 = inlined_call_operand.hbm [shape: bf16[128,128], index: 0, kind: input, shape index: {}]
  %s1 = inlined_call_operand.hbm [shape: f32[128,128], index: 1, kind: input, shape index: {}]
  %s2 = inlined_call_operand.hbm [shape: f32[128,128], index: 2, kind: input, shape index: {}]
  %s3 = inlined_call_operand.vmem [shape: f32[1,128], index: 3, kind: input, shape index: {}]
  %s4 = inlined_call_operand.hbm [shape: f32[128,128], index: 4, kind: output, shape index: {}]
  %s5 = sld [smem:[#allocation0]]
  $region46: #{tpu_custom_call.1} parent=0
    _
  %s7 = ssub.s32 1, %s5
  %s8 = scalar_select 0, %s7, %s5
  $region1: #{tpu_custom_call.1} parent=0
    #allocation3 [shape = 'u8[32768]{0}', space=vmem, size = 0x8000, scoped, tag = 'input window, operand 0, single buffered']
    #allocation4 [shape = 's32[1]{0}', space=sflag, size = 0x4, scoped, tag = 'scoped memory for tpu_custom_call.1']
    #allocation5 [shape = 's32[1]{0}', space=sflag, size = 0x4, scoped, tag = 'scoped memory for tpu_custom_call.1']
    #allocation6 [shape = 'u8[65536]{0}', space=vmem, size = 0x10000, scoped, tag = 'input window, operand 1, single buffered']
    #allocation7 [shape = 's32[1]{0}', space=sflag, size = 0x4, scoped, tag = 'scoped memory for tpu_custom_call.1']
    #allocation8 [shape = 'u8[65536]{0}', space=vmem, size = 0x10000, scoped, tag = 'input window, operand 2, single buffered']
    #allocation9 [shape = 'u8[65536]{0}', space=vmem, size = 0x10000, scoped, tag = 'output window, operand 0, single buffered']
    %9 = vsyncpa [#allocation4], 0
    %10 = vsyncpa [#allocation7], 0
    %11 = vsyncpa [#allocation5], 0
    // Predicated region
    $region2: #{tpu_custom_call.1} parent=1 // pred_check
      _
    $region3: #{tpu_custom_call.1} parent=1 // pred_check_branch
      %13 = sbr.rel (0) target = $region5
    $region4: #{tpu_custom_call.1} parent=1 // pred_region
      %s15 = ssub.s32 1024, 1024
      %16 = vsyncadd [#allocation4], %s15
      %s17 = sshll.u32 [#allocation3], 4
      %s18 = int_to_ptr.vmem [resolvable:$true] %s17
      %23 = dma.hbm_to_vmem [thread:$0]  %s0, 1024, %s18, [#allocation4], 64, 64, 4
    $region5: #{tpu_custom_call.1} parent=1 // pred_fallthru
      _
    // Predicated region
    $region6: #{tpu_custom_call.1} parent=1 // pred_check
      _
    $region7: #{tpu_custom_call.1} parent=1 // pred_check_branch
      %25 = sbr.rel (0) target = $region9
    $region8: #{tpu_custom_call.1} parent=1 // pred_region
      %s27 = ssub.s32 2048, 2048
      %28 = vsyncadd [#allocation7], %s27
      %s29 = sshll.u32 [#allocation6], 4
      %s30 = int_to_ptr.vmem [resolvable:$true] %s29
      %35 = dma.hbm_to_vmem [thread:$0]  %s1, 2048, %s30, [#allocation7], 128, 128, 8
    $region9: #{tpu_custom_call.1} parent=1 // pred_fallthru
      _
    // Predicated region
    $region10: #{tpu_custom_call.1} parent=1 // pred_check
      _
    $region11: #{tpu_custom_call.1} parent=1 // pred_check_branch
      %37 = sbr.rel (0) target = $region13
    $region12: #{tpu_custom_call.1} parent=1 // pred_region
      %s39 = ssub.s32 2048, 2048
      %40 = vsyncadd [#allocation7], %s39
      %s41 = sshll.u32 [#allocation8], 4
      %s42 = int_to_ptr.vmem [resolvable:$true] %s41
      %47 = dma.hbm_to_vmem [thread:$0]  %s2, 2048, %s42, [#allocation7], 128, 128, 8
    $region13: #{tpu_custom_call.1} parent=1 // pred_fallthru
      _
    // Predicated region
    $region14: #{tpu_custom_call.1} parent=1 // pred_check
      _
    $region15: #{tpu_custom_call.1} parent=1 // pred_check_branch
      %49 = sbr.rel (0) target = $region17
    $region16: #{tpu_custom_call.1} parent=1 // pred_region
      _
    $region17: #{tpu_custom_call.1} parent=1 // pred_fallthru
      _
    // Predicated region
    $region18: #{tpu_custom_call.1} parent=1 // pred_check
      _
    $region19: #{tpu_custom_call.1} parent=1 // pred_check_branch
      %51 = sbr.rel (0) target = $region21
    $region20: #{tpu_custom_call.1} parent=1 // pred_region
      %52 = dma.done [#allocation4], 1024
    $region21: #{tpu_custom_call.1} parent=1 // pred_fallthru
      _
    // Predicated region
    $region22: #{tpu_custom_call.1} parent=1 // pred_check
      _
    $region23: #{tpu_custom_call.1} parent=1 // pred_check_branch
      %54 = sbr.rel (0) target = $region25
    $region24: #{tpu_custom_call.1} parent=1 // pred_region
      %55 = dma.done [#allocation7], 2048
    $region25: #{tpu_custom_call.1} parent=1 // pred_fallthru
      _
    // Predicated region
    $region26: #{tpu_custom_call.1} parent=1 // pred_check
      _
    $region27: #{tpu_custom_call.1} parent=1 // pred_check_branch
      %57 = sbr.rel (0) target = $region29
    $region28: #{tpu_custom_call.1} parent=1 // pred_region
      %58 = dma.done [#allocation7], 2048
    $region29: #{tpu_custom_call.1} parent=1 // pred_fallthru
      _
    %p60 = scmp.eq.s32.totalorder 0, 0
    // Predicated region
    $region30: #{tpu_custom_call.1} parent=1 // pred_check
      %p61 = pneg %p60
    $region31: #{tpu_custom_call.1} parent=1 // pred_check_branch
      %63 = sbr.rel (%p61) target = $region33
    $region32: #{tpu_custom_call.1} parent=1 // pred_region
      %64 = vst [vmem:[#allocation2] sm:$0xff] 0.0
      %65 = vst [vmem:[#allocation2 + $0x8] sm:$0xff] 0.0
      %66 = vst [vmem:[#allocation2 + $0x10] sm:$0xff] 0.0
      %67 = vst [vmem:[#allocation2 + $0x18] sm:$0xff] 0.0
      %68 = vst [vmem:[#allocation2 + $0x20] sm:$0xff] 0.0
      %69 = vst [vmem:[#allocation2 + $0x28] sm:$0xff] 0.0
      %70 = vst [vmem:[#allocation2 + $0x30] sm:$0xff] 0.0
      %71 = vst [vmem:[#allocation2 + $0x38] sm:$0xff] 0.0
      %72 = vst [vmem:[#allocation2 + $0x40] sm:$0xff] 0.0
      %73 = vst [vmem:[#allocation2 + $0x48] sm:$0xff] 0.0
      %74 = vst [vmem:[#allocation2 + $0x50] sm:$0xff] 0.0
      %75 = vst [vmem:[#allocation2 + $0x58] sm:$0xff] 0.0
      %76 = vst [vmem:[#allocation2 + $0x60] sm:$0xff] 0.0
      %77 = vst [vmem:[#allocation2 + $0x68] sm:$0xff] 0.0
      %78 = vst [vmem:[#allocation2 + $0x70] sm:$0xff] 0.0
      %79 = vst [vmem:[#allocation2 + $0x78] sm:$0xff] 0.0
    $region33: #{tpu_custom_call.1} parent=1 // pred_fallthru
      _
    %v80 = vld [vmem:[#allocation6] sm:$0xff]
    %v81 = vld [vmem:[#allocation6 + $0x8] sm:$0xff]
    %v82 = vld [vmem:[#allocation6 + $0x10] sm:$0xff]
    %v83 = vld [vmem:[#allocation6 + $0x18] sm:$0xff]
    %v84 = vld [vmem:[#allocation6 + $0x20] sm:$0xff]
    %v85 = vld [vmem:[#allocation6 + $0x28] sm:$0xff]
    %v86 = vld [vmem:[#allocation6 + $0x30] sm:$0xff]
    %v87 = vld [vmem:[#allocation6 + $0x38] sm:$0xff]
    %v88 = vld [vmem:[#allocation6 + $0x40] sm:$0xff]
    %v89 = vld [vmem:[#allocation6 + $0x48] sm:$0xff]
    %v90 = vld [vmem:[#allocation6 + $0x50] sm:$0xff]
    %v91 = vld [vmem:[#allocation6 + $0x58] sm:$0xff]
    %v92 = vld [vmem:[#allocation6 + $0x60] sm:$0xff]
    %v93 = vld [vmem:[#allocation6 + $0x68] sm:$0xff]
    %v94 = vld [vmem:[#allocation6 + $0x70] sm:$0xff]
    %v95 = vld [vmem:[#allocation6 + $0x78] sm:$0xff]
    %v96 = vld [vmem:[#allocation8] sm:$0xff]
    %v97 = vld [vmem:[#allocation8 + $0x8] sm:$0xff]
    %v98 = vld [vmem:[#allocation8 + $0x10] sm:$0xff]
    %v99 = vld [vmem:[#allocation8 + $0x18] sm:$0xff]
    %v100 = vld [vmem:[#allocation8 + $0x20] sm:$0xff]
    %v101 = vld [vmem:[#allocation8 + $0x28] sm:$0xff]
    %v102 = vld [vmem:[#allocation8 + $0x30] sm:$0xff]
    %v103 = vld [vmem:[#allocation8 + $0x38] sm:$0xff]
    %v104 = vld [vmem:[#allocation8 + $0x40] sm:$0xff]
    %v105 = vld [vmem:[#allocation8 + $0x48] sm:$0xff]
    %v106 = vld [vmem:[#allocation8 + $0x50] sm:$0xff]
    %v107 = vld [vmem:[#allocation8 + $0x58] sm:$0xff]
    %v108 = vld [vmem:[#allocation8 + $0x60] sm:$0xff]
    %v109 = vld [vmem:[#allocation8 + $0x68] sm:$0xff]
    %v110 = vld [vmem:[#allocation8 + $0x70] sm:$0xff]
    %v111 = vld [vmem:[#allocation8 + $0x78] sm:$0xff]
    %112 = vmatprep.subr.mxu0 0.0
    %113 = vmatpush1.msra.mxu0 %v96
    %114 = vmatprep.subr.mxu0 0.0
    %115 = vmatpush1.msra.mxu0 %v97
    %116 = vmatprep.subr.mxu0 0.0
    %117 = vmatpush1.msra.mxu0 %v98
    %118 = vmatprep.subr.mxu0 0.0
    %119 = vmatpush1.msra.mxu0 %v99
    %120 = vmatprep.subr.mxu0 0.0
    %121 = vmatpush1.msra.mxu0 %v100
    %122 = vmatprep.subr.mxu0 0.0
    %123 = vmatpush1.msra.mxu0 %v101
    %124 = vmatprep.subr.mxu0 0.0
    %125 = vmatpush1.msra.mxu0 %v102
    %126 = vmatprep.subr.mxu0 0.0
    %127 = vmatpush1.msra.mxu0 %v103
    %128 = vmatprep.subr.mxu0 0.0
    %129 = vmatpush1.msra.mxu0 %v104
    %130 = vmatprep.subr.mxu0 0.0
    %131 = vmatpush1.msra.mxu0 %v105
    %132 = vmatprep.subr.mxu0 0.0
    %133 = vmatpush1.msra.mxu0 %v106
    %134 = vmatprep.subr.mxu0 0.0
    %135 = vmatpush1.msra.mxu0 %v107
    %136 = vmatprep.subr.mxu0 0.0
    %137 = vmatpush1.msra.mxu0 %v108
    %138 = vmatprep.subr.mxu0 0.0
    %139 = vmatpush1.msra.mxu0 %v109
    %140 = vmatprep.subr.mxu0 0.0
    %141 = vmatpush1.msra.mxu0 %v110
    %142 = vmatprep.subr.mxu0 0.0
    %143 = vmatpush1.msra.mxu0 %v111
    %144 = vmatprep.subr.mxu0 0.0
    %145 = vmatpush1.msra.mxu0 0.0
    %146 = vmatprep.subr.mxu0 0.0
    %147 = vmatpush1.msra.mxu0 0.0
    %148 = vmatprep.subr.mxu0 0.0
    %149 = vmatpush1.msra.mxu0 0.0
    %150 = vmatprep.subr.mxu0 0.0
    %151 = vmatpush1.msra.mxu0 0.0
    %152 = vmatprep.subr.mxu0 0.0
    %153 = vmatpush1.msra.mxu0 0.0
    %154 = vmatprep.subr.mxu0 0.0
    %155 = vmatpush1.msra.mxu0 0.0
    %156 = vmatprep.subr.mxu0 0.0
    %157 = vmatpush1.msra.mxu0 0.0
    %158 = vmatprep.subr.mxu0 0.0
    %159 = vmatpush1.msra.mxu0 0.0
    %160 = vmatprep.subr.mxu0 0.0
    %161 = vmatpush1.msra.mxu0 0.0
    %162 = vmatprep.subr.mxu0 0.0
    %163 = vmatpush1.msra.mxu0 0.0
    %164 = vmatprep.subr.mxu0 0.0
    %165 = vmatpush1.msra.mxu0 0.0
    %166 = vmatprep.subr.mxu0 0.0
    %167 = vmatpush1.msra.mxu0 0.0
    %168 = vmatprep.subr.mxu0 0.0
    %169 = vmatpush1.msra.mxu0 0.0
    %170 = vmatprep.subr.mxu0 0.0
    %171 = vmatpush1.msra.mxu0 0.0
    %172 = vmatprep.subr.mxu0 0.0
    %173 = vmatpush1.msra.mxu0 0.0
    %174 = vmatprep.subr.mxu0 0.0
    %175 = vmatpush1.msra.mxu0 0.0
    %176 = vmatprep.mubr.f32.mxu0 0.0
    %177 = vmatmul.mubr.f32.gmra.mrb[0].mxu0 %v80
    %v178 = vpop.f32.mrb[0].mxu0
    %v179 = vadd.f32 0.0, %v178
    %v180 = vpop.f32.mrb[0].mxu0
    %181 = vmatprep.mubr.f32.mxu0 0.0
    %182 = vmatmul.mubr.f32.gmra.mrb[0].mxu0 %v81
    %v183 = vpop.f32.mrb[0].mxu0
    %v184 = vadd.f32 0.0, %v183
    %v185 = vpop.f32.mrb[0].mxu0
    %186 = vmatprep.mubr.f32.mxu0 0.0
    %187 = vmatmul.mubr.f32.gmra.mrb[0].mxu0 %v82
    %v188 = vpop.f32.mrb[0].mxu0
    %v189 = vadd.f32 0.0, %v188
    %v190 = vpop.f32.mrb[0].mxu0
    %191 = vmatprep.mubr.f32.mxu0 0.0
    %192 = vmatmul.mubr.f32.gmra.mrb[0].mxu0 %v83
    %v193 = vpop.f32.mrb[0].mxu0
    %v194 = vadd.f32 0.0, %v193
    %v195 = vpop.f32.mrb[0].mxu0
    %196 = vmatprep.mubr.f32.mxu0 0.0
    %197 = vmatmul.mubr.f32.gmra.mrb[0].mxu0 %v84
    %v198 = vpop.f32.mrb[0].mxu0
    %v199 = vadd.f32 0.0, %v198
    %v200 = vpop.f32.mrb[0].mxu0
    %201 = vmatprep.mubr.f32.mxu0 0.0
    %202 = vmatmul.mubr.f32.gmra.mrb[0].mxu0 %v85
    %v203 = vpop.f32.mrb[0].mxu0
    %v204 = vadd.f32 0.0, %v203
    %v205 = vpop.f32.mrb[0].mxu0
    %206 = vmatprep.mubr.f32.mxu0 0.0
    %207 = vmatmul.mubr.f32.gmra.mrb[0].mxu0 %v86
    %v208 = vpop.f32.mrb[0].mxu0
    %v209 = vadd.f32 0.0, %v208
    %v210 = vpop.f32.mrb[0].mxu0
    %211 = vmatprep.mubr.f32.mxu0 0.0
    %212 = vmatmul.mubr.f32.gmra.mrb[0].mxu0 %v87
    %v213 = vpop.f32.mrb[0].mxu0
    %v214 = vadd.f32 0.0, %v213
    %v215 = vpop.f32.mrb[0].mxu0
    %216 = vmatprep.mubr.f32.mxu0 0.0
    %217 = vmatmul.mubr.f32.gmra.mrb[0].mxu0 %v88
    %v218 = vpop.f32.mrb[0].mxu0
    %v219 = vadd.f32 0.0, %v218
    %v220 = vpop.f32.mrb[0].mxu0
    %221 = vmatprep.mubr.f32.mxu0 0.0
    %222 = vmatmul.mubr.f32.gmra.mrb[0].mxu0 %v89
    %v223 = vpop.f32.mrb[0].mxu0
    %v224 = vadd.f32 0.0, %v223
    %v225 = vpop.f32.mrb[0].mxu0
    %226 = vmatprep.mubr.f32.mxu0 0.0
    %227 = vmatmul.mubr.f32.gmra.mrb[0].mxu0 %v90
    %v228 = vpop.f32.mrb[0].mxu0
    %v229 = vadd.f32 0.0, %v228
    %v230 = vpop.f32.mrb[0].mxu0
    %231 = vmatprep.mubr.f32.mxu0 0.0
    %232 = vmatmul.mubr.f32.gmra.mrb[0].mxu0 %v91
    %v233 = vpop.f32.mrb[0].mxu0
    %v234 = vadd.f32 0.0, %v233
    %v235 = vpop.f32.mrb[0].mxu0
    %236 = vmatprep.mubr.f32.mxu0 0.0
    %237 = vmatmul.mubr.f32.gmra.mrb[0].mxu0 %v92
    %v238 = vpop.f32.mrb[0].mxu0
    %v239 = vadd.f32 0.0, %v238
    %v240 = vpop.f32.mrb[0].mxu0
    %241 = vmatprep.mubr.f32.mxu0 0.0
    %242 = vmatmul.mubr.f32.gmra.mrb[0].mxu0 %v93
    %v243 = vpop.f32.mrb[0].mxu0
    %v244 = vadd.f32 0.0, %v243
    %v245 = vpop.f32.mrb[0].mxu0
    %246 = vmatprep.mubr.f32.mxu0 0.0
    %247 = vmatmul.mubr.f32.gmra.mrb[0].mxu0 %v94
    %v248 = vpop.f32.mrb[0].mxu0
    %v249 = vadd.f32 0.0, %v248
    %v250 = vpop.f32.mrb[0].mxu0
    %251 = vmatprep.mubr.f32.mxu0 0.0
    %252 = vmatmul.mubr.f32.gmra.mrb[0].mxu0 %v95
    %v253 = vpop.f32.mrb[0].mxu0
    %v254 = vadd.f32 0.0, %v253
    %v255 = vpop.f32.mrb[0].mxu0
    %256 = vdwg.mxu0
    %v257 = vld [vmem:[#allocation2] sm:$0xff]
    %v258 = vld [vmem:[#allocation2 + $0x8] sm:$0xff]
    %v259 = vld [vmem:[#allocation2 + $0x10] sm:$0xff]
    %v260 = vld [vmem:[#allocation2 + $0x18] sm:$0xff]
    %v261 = vld [vmem:[#allocation2 + $0x20] sm:$0xff]
    %v262 = vld [vmem:[#allocation2 + $0x28] sm:$0xff]
    %v263 = vld [vmem:[#allocation2 + $0x30] sm:$0xff]
    %v264 = vld [vmem:[#allocation2 + $0x38] sm:$0xff]
    %v265 = vld [vmem:[#allocation2 + $0x40] sm:$0xff]
    %v266 = vld [vmem:[#allocation2 + $0x48] sm:$0xff]
    %v267 = vld [vmem:[#allocation2 + $0x50] sm:$0xff]
    %v268 = vld [vmem:[#allocation2 + $0x58] sm:$0xff]
    %v269 = vld [vmem:[#allocation2 + $0x60] sm:$0xff]
    %v270 = vld [vmem:[#allocation2 + $0x68] sm:$0xff]
    %v271 = vld [vmem:[#allocation2 + $0x70] sm:$0xff]
    %v272 = vld [vmem:[#allocation2 + $0x78] sm:$0xff]
    %v273 = vld [vmem:[#allocation3] sm:$0xf]
    %v274 = vld [vmem:[#allocation3 + $0x4] sm:$0xf]
    %v275 = vld [vmem:[#allocation3 + $0x8] sm:$0xf]
    %v276 = vld [vmem:[#allocation3 + $0xc] sm:$0xf]
    %v277 = vld [vmem:[#allocation3 + $0x10] sm:$0xf]
    %v278 = vld [vmem:[#allocation3 + $0x14] sm:$0xf]
    %v279 = vld [vmem:[#allocation3 + $0x18] sm:$0xf]
    %v280 = vld [vmem:[#allocation3 + $0x1c] sm:$0xf]
    %v281 = vld [vmem:[#allocation3 + $0x20] sm:$0xf]
    %v282 = vld [vmem:[#allocation3 + $0x24] sm:$0xf]
    %v283 = vld [vmem:[#allocation3 + $0x28] sm:$0xf]
    %v284 = vld [vmem:[#allocation3 + $0x2c] sm:$0xf]
    %v285 = vld [vmem:[#allocation3 + $0x30] sm:$0xf]
    %v286 = vld [vmem:[#allocation3 + $0x34] sm:$0xf]
    %v287 = vld [vmem:[#allocation3 + $0x38] sm:$0xf]
    %v288 = vld [vmem:[#allocation3 + $0x3c] sm:$0xf]
    %v289 = vpack.c.bf16 %v184, %v179
    %v290 = vpack.c.bf16 %v194, %v189
    %v291 = vpack.c.bf16 %v204, %v199
    %v292 = vpack.c.bf16 %v214, %v209
    %v293 = vpack.c.bf16 %v224, %v219
    %v294 = vpack.c.bf16 %v234, %v229
    %v295 = vpack.c.bf16 %v244, %v239
    %v296 = vpack.c.bf16 %v254, %v249
    %v313 = vunpack.c.l.b16 %v273
    %v314 = vunpack.c.l.b16 %v274
    %v315 = vunpack.c.l.b16 %v275
    %v316 = vunpack.c.l.b16 %v276
    %v317 = vunpack.c.l.b16 %v277
    %v318 = vunpack.c.l.b16 %v278
    %v319 = vunpack.c.l.b16 %v279
    %v320 = vunpack.c.l.b16 %v280
    %v321 = vunpack.c.l.b16 %v281
    %v322 = vunpack.c.l.b16 %v282
    %v323 = vunpack.c.l.b16 %v283
    %v324 = vunpack.c.l.b16 %v284
    %v325 = vunpack.c.l.b16 %v285
    %v326 = vunpack.c.l.b16 %v286
    %v327 = vunpack.c.l.b16 %v287
    %v328 = vunpack.c.l.b16 %v288
    %v329 = vpack.c.b16 %v314, %v313
    %v330 = vpack.c.b16 %v316, %v315
    %v331 = vpack.c.b16 %v318, %v317
    %v332 = vpack.c.b16 %v320, %v319
    %v333 = vpack.c.b16 %v322, %v321
    %v334 = vpack.c.b16 %v324, %v323
    %v335 = vpack.c.b16 %v326, %v325
    %v336 = vpack.c.b16 %v328, %v327
    %345 = vmatprep.subr.bf16.mxu0 0
    %346 = vmatpush1.bf16.msra.mxu0 %v289
    %347 = vmatprep.subr.bf16.mxu0 0
    %348 = vmatpush1.bf16.msra.mxu0 %v290
    %349 = vmatprep.subr.bf16.mxu0 0
    %350 = vmatpush1.bf16.msra.mxu0 %v291
    %351 = vmatprep.subr.bf16.mxu0 0
    %352 = vmatpush1.bf16.msra.mxu0 %v292
    %353 = vmatprep.subr.bf16.mxu0 0
    %354 = vmatpush1.bf16.msra.mxu0 %v293
    %355 = vmatprep.subr.bf16.mxu0 0
    %356 = vmatpush1.bf16.msra.mxu0 %v294
    %357 = vmatprep.subr.bf16.mxu0 0
    %358 = vmatpush1.bf16.msra.mxu0 %v295
    %359 = vmatprep.subr.bf16.mxu0 0
    %360 = vmatpush1.bf16.msra.mxu0 %v296
    %361 = vmatprep.subr.bf16.mxu0 0
    %362 = vmatpush1.bf16.msra.mxu0 0
    %363 = vmatprep.subr.bf16.mxu0 0
    %364 = vmatpush1.bf16.msra.mxu0 0
    %365 = vmatprep.subr.bf16.mxu0 0
    %366 = vmatpush1.bf16.msra.mxu0 0
    %367 = vmatprep.subr.bf16.mxu0 0
    %368 = vmatpush1.bf16.msra.mxu0 0
    %369 = vmatprep.subr.bf16.mxu0 0
    %370 = vmatpush1.bf16.msra.mxu0 0
    %371 = vmatprep.subr.bf16.mxu0 0
    %372 = vmatpush1.bf16.msra.mxu0 0
    %373 = vmatprep.subr.bf16.mxu0 0
    %374 = vmatpush1.bf16.msra.mxu0 0
    %375 = vmatprep.subr.bf16.mxu0 0
    %376 = vmatpush1.bf16.msra.mxu0 0
    %377 = vmatprep.mubr.bf16.mxu0 0
    %378 = vmatmul.mubr.bf16.gmra.mrb[0].mxu0 %v329
    %v379 = vpop.f32.mrb[0].mxu0
    %v380 = vadd.f32 0.0, %v379
    %v381 = vpop.f32.mrb[0].mxu0
    %v382 = vpop.f32.mrb[0].mxu0
    %v383 = vadd.f32 0.0, %v382
    %v384 = vpop.f32.mrb[0].mxu0
    %385 = vmatprep.mubr.bf16.mxu0 0
    %386 = vmatmul.mubr.bf16.gmra.mrb[0].mxu0 %v330
    %v387 = vpop.f32.mrb[0].mxu0
    %v388 = vadd.f32 0.0, %v387
    %v389 = vpop.f32.mrb[0].mxu0
    %v390 = vpop.f32.mrb[0].mxu0
    %v391 = vadd.f32 0.0, %v390
    %v392 = vpop.f32.mrb[0].mxu0
    %393 = vmatprep.mubr.bf16.mxu0 0
    %394 = vmatmul.mubr.bf16.gmra.mrb[0].mxu0 %v331
    %v395 = vpop.f32.mrb[0].mxu0
    %v396 = vadd.f32 0.0, %v395
    %v397 = vpop.f32.mrb[0].mxu0
    %v398 = vpop.f32.mrb[0].mxu0
    %v399 = vadd.f32 0.0, %v398
    %v400 = vpop.f32.mrb[0].mxu0
    %401 = vmatprep.mubr.bf16.mxu0 0
    %402 = vmatmul.mubr.bf16.gmra.mrb[0].mxu0 %v332
    %v403 = vpop.f32.mrb[0].mxu0
    %v404 = vadd.f32 0.0, %v403
    %v405 = vpop.f32.mrb[0].mxu0
    %v406 = vpop.f32.mrb[0].mxu0
    %v407 = vadd.f32 0.0, %v406
    %v408 = vpop.f32.mrb[0].mxu0
    %409 = vmatprep.mubr.bf16.mxu0 0
    %410 = vmatmul.mubr.bf16.gmra.mrb[0].mxu0 %v333
    %v411 = vpop.f32.mrb[0].mxu0
    %v412 = vadd.f32 0.0, %v411
    %v413 = vpop.f32.mrb[0].mxu0
    %v414 = vpop.f32.mrb[0].mxu0
    %v415 = vadd.f32 0.0, %v414
    %v416 = vpop.f32.mrb[0].mxu0
    %417 = vmatprep.mubr.bf16.mxu0 0
    %418 = vmatmul.mubr.bf16.gmra.mrb[0].mxu0 %v334
    %v419 = vpop.f32.mrb[0].mxu0
    %v420 = vadd.f32 0.0, %v419
    %v421 = vpop.f32.mrb[0].mxu0
    %v422 = vpop.f32.mrb[0].mxu0
    %v423 = vadd.f32 0.0, %v422
    %v424 = vpop.f32.mrb[0].mxu0
    %425 = vmatprep.mubr.bf16.mxu0 0
    %426 = vmatmul.mubr.bf16.gmra.mrb[0].mxu0 %v335
    %v427 = vpop.f32.mrb[0].mxu0
    %v428 = vadd.f32 0.0, %v427
    %v429 = vpop.f32.mrb[0].mxu0
    %v430 = vpop.f32.mrb[0].mxu0
    %v431 = vadd.f32 0.0, %v430
    %v432 = vpop.f32.mrb[0].mxu0
    %433 = vmatprep.mubr.bf16.mxu0 0
    %434 = vmatmul.mubr.bf16.gmra.mrb[0].mxu0 %v336
    %v435 = vpop.f32.mrb[0].mxu0
    %v436 = vadd.f32 0.0, %v435
    %v437 = vpop.f32.mrb[0].mxu0
    %v438 = vpop.f32.mrb[0].mxu0
    %v439 = vadd.f32 0.0, %v438
    %v440 = vpop.f32.mrb[0].mxu0
    %441 = vdwg.mxu0
    %v442 = vadd.f32 %v257, %v380
    %v443 = vadd.f32 %v258, %v383
    %v444 = vadd.f32 %v259, %v388
    %v445 = vadd.f32 %v260, %v391
    %v446 = vadd.f32 %v261, %v396
    %v447 = vadd.f32 %v262, %v399
    %v448 = vadd.f32 %v263, %v404
    %v449 = vadd.f32 %v264, %v407
    %v450 = vadd.f32 %v265, %v412
    %v451 = vadd.f32 %v266, %v415
    %v452 = vadd.f32 %v267, %v420
    %v453 = vadd.f32 %v268, %v423
    %v454 = vadd.f32 %v269, %v428
    %v455 = vadd.f32 %v270, %v431
    %v456 = vadd.f32 %v271, %v436
    %v457 = vadd.f32 %v272, %v439
    %458 = vst [vmem:[#allocation2] sm:$0xff] %v442
    %459 = vst [vmem:[#allocation2 + $0x8] sm:$0xff] %v443
    %460 = vst [vmem:[#allocation2 + $0x10] sm:$0xff] %v444
    %461 = vst [vmem:[#allocation2 + $0x18] sm:$0xff] %v445
    %462 = vst [vmem:[#allocation2 + $0x20] sm:$0xff] %v446
    %463 = vst [vmem:[#allocation2 + $0x28] sm:$0xff] %v447
    %464 = vst [vmem:[#allocation2 + $0x30] sm:$0xff] %v448
    %465 = vst [vmem:[#allocation2 + $0x38] sm:$0xff] %v449
    %466 = vst [vmem:[#allocation2 + $0x40] sm:$0xff] %v450
    %467 = vst [vmem:[#allocation2 + $0x48] sm:$0xff] %v451
    %468 = vst [vmem:[#allocation2 + $0x50] sm:$0xff] %v452
    %469 = vst [vmem:[#allocation2 + $0x58] sm:$0xff] %v453
    %470 = vst [vmem:[#allocation2 + $0x60] sm:$0xff] %v454
    %471 = vst [vmem:[#allocation2 + $0x68] sm:$0xff] %v455
    %472 = vst [vmem:[#allocation2 + $0x70] sm:$0xff] %v456
    %473 = vst [vmem:[#allocation2 + $0x78] sm:$0xff] %v457
    // Predicated region
    $region34: #{tpu_custom_call.1} parent=1 // pred_check
      %p474 = pneg %p60
    $region35: #{tpu_custom_call.1} parent=1 // pred_check_branch
      %476 = sbr.rel (%p474) target = $region37
    $region36: #{tpu_custom_call.1} parent=1 // pred_region
      %v477 = vld [vmem:[#allocation2] sm:$0xff]
      %v478 = vld [vmem:[#allocation2 + $0x8] sm:$0xff]
      %v479 = vld [vmem:[#allocation2 + $0x10] sm:$0xff]
      %v480 = vld [vmem:[#allocation2 + $0x18] sm:$0xff]
      %v481 = vld [vmem:[#allocation2 + $0x20] sm:$0xff]
      %v482 = vld [vmem:[#allocation2 + $0x28] sm:$0xff]
      %v483 = vld [vmem:[#allocation2 + $0x30] sm:$0xff]
      %v484 = vld [vmem:[#allocation2 + $0x38] sm:$0xff]
      %v485 = vld [vmem:[#allocation2 + $0x40] sm:$0xff]
      %v486 = vld [vmem:[#allocation2 + $0x48] sm:$0xff]
      %v487 = vld [vmem:[#allocation2 + $0x50] sm:$0xff]
      %v488 = vld [vmem:[#allocation2 + $0x58] sm:$0xff]
      %v489 = vld [vmem:[#allocation2 + $0x60] sm:$0xff]
      %v490 = vld [vmem:[#allocation2 + $0x68] sm:$0xff]
      %v491 = vld [vmem:[#allocation2 + $0x70] sm:$0xff]
      %v492 = vld [vmem:[#allocation2 + $0x78] sm:$0xff]
      %v493 = vld [vmem:[%s3] sm:$0x1]
      %v495 = vlaneseq
      %v496 = vshrl.u32 %v495, 7
      %v497 = vsub.s32 0, %v496
      %v498 = vrot.slane %v493, %v497
      %v500 = vadd.f32 %v477, %v498
      %v501 = vadd.f32 %v478, %v498
      %v502 = vadd.f32 %v479, %v498
      %v503 = vadd.f32 %v480, %v498
      %v504 = vadd.f32 %v481, %v498
      %v505 = vadd.f32 %v482, %v498
      %v506 = vadd.f32 %v483, %v498
      %v507 = vadd.f32 %v484, %v498
      %v508 = vadd.f32 %v485, %v498
      %v509 = vadd.f32 %v486, %v498
      %v510 = vadd.f32 %v487, %v498
      %v511 = vadd.f32 %v488, %v498
      %v512 = vadd.f32 %v489, %v498
      %v513 = vadd.f32 %v490, %v498
      %v514 = vadd.f32 %v491, %v498
      %v515 = vadd.f32 %v492, %v498
      %v516 = vmax.f32 %v500, 0.0
      %v517 = vmax.f32 %v501, 0.0
      %v518 = vmax.f32 %v502, 0.0
      %v519 = vmax.f32 %v503, 0.0
      %v520 = vmax.f32 %v504, 0.0
      %v521 = vmax.f32 %v505, 0.0
      %v522 = vmax.f32 %v506, 0.0
      %v523 = vmax.f32 %v507, 0.0
      %v524 = vmax.f32 %v508, 0.0
      %v525 = vmax.f32 %v509, 0.0
      %v526 = vmax.f32 %v510, 0.0
      %v527 = vmax.f32 %v511, 0.0
      %v528 = vmax.f32 %v512, 0.0
      %v529 = vmax.f32 %v513, 0.0
      %v530 = vmax.f32 %v514, 0.0
      %v531 = vmax.f32 %v515, 0.0
      %532 = vst [vmem:[#allocation9] sm:$0xff] %v516
      %533 = vst [vmem:[#allocation9 + $0x8] sm:$0xff] %v517
      %534 = vst [vmem:[#allocation9 + $0x10] sm:$0xff] %v518
      %535 = vst [vmem:[#allocation9 + $0x18] sm:$0xff] %v519
      %536 = vst [vmem:[#allocation9 + $0x20] sm:$0xff] %v520
      %537 = vst [vmem:[#allocation9 + $0x28] sm:$0xff] %v521
      %538 = vst [vmem:[#allocation9 + $0x30] sm:$0xff] %v522
      %539 = vst [vmem:[#allocation9 + $0x38] sm:$0xff] %v523
      %540 = vst [vmem:[#allocation9 + $0x40] sm:$0xff] %v524
      %541 = vst [vmem:[#allocation9 + $0x48] sm:$0xff] %v525
      %542 = vst [vmem:[#allocation9 + $0x50] sm:$0xff] %v526
      %543 = vst [vmem:[#allocation9 + $0x58] sm:$0xff] %v527
      %544 = vst [vmem:[#allocation9 + $0x60] sm:$0xff] %v528
      %545 = vst [vmem:[#allocation9 + $0x68] sm:$0xff] %v529
      %546 = vst [vmem:[#allocation9 + $0x70] sm:$0xff] %v530
      %547 = vst [vmem:[#allocation9 + $0x78] sm:$0xff] %v531
    $region37: #{tpu_custom_call.1} parent=1 // pred_fallthru
      _
    // Predicated region
    $region38: #{tpu_custom_call.1} parent=1 // pred_check
      _
    $region39: #{tpu_custom_call.1} parent=1 // pred_check_branch
      %549 = sbr.rel (0) target = $region41
    $region40: #{tpu_custom_call.1} parent=1 // pred_region
      %s551 = ssub.s32 2048, 2048
      %552 = vsyncadd [#allocation5], %s551
      %s553 = sshll.u32 [#allocation9], 4
      %s554 = int_to_ptr.vmem [resolvable:$true] %s553
      %559 = dma.vmem_to_hbm [thread:$0]  %s554, 2048, %s4, [#allocation5], 128, 128, 8
    $region41: #{tpu_custom_call.1} parent=1 // pred_fallthru
      _
    // Predicated region
    $region42: #{tpu_custom_call.1} parent=1 // pred_check
      _
    $region43: #{tpu_custom_call.1} parent=1 // pred_check_branch
      %561 = sbr.rel (0) target = $region45
    $region44: #{tpu_custom_call.1} parent=1 // pred_region
      %562 = dma.done [#allocation5], 2048
    $region45: #{tpu_custom_call.1} parent=1 // pred_fallthru
      _
    %563 = vsyncpa [#allocation4], 1
    %564 = vsyncpa [#allocation7], 1
    %565 = vsyncpa [#allocation5], 1

</llo_original>
